<compile_context>
chip_gen: v5e
topology: v5e:2x2
jax: 0.10.0
libtpu: 0.0.40
codegen_flags: <defaults>
</compile_context>

<pallas_src>
import jax
import jax.numpy as jnp
from jax.experimental import pallas as pl
from jax.experimental.pallas import tpu as pltpu

TIME_WINDOWS = 8
RATIO = 4


def ta_kernel(x_ref, w1t_ref, w2t_ref, o_ref):
    # x block: (BN, T, D); w1t: (T, T//r); w2t: (T//r, T)
    xf = x_ref[...].astype(jnp.float32)                       # (BN, T, D)
    bn, t, d = xf.shape

    # AdaptiveAvgPool1d(1) / AdaptiveMaxPool1d(1) over the feature axis D.
    avg = jnp.sum(xf, axis=-1) * (1.0 / d)                    # (BN, T)
    mx = jnp.max(xf, axis=-1)                                 # (BN, T)

    w1t = w1t_ref[...]                                        # (T, T//r)
    w2t = w2t_ref[...]                                        # (T//r, T)

    # Shared bias-free MLP (Linear -> ReLU -> Linear) applied along the time
    # axis, batched over the whole BN chunk in two small matmuls per branch.
    def shared_mlp(v):                                        # (BN, T) -> (BN, T)
        h = jnp.maximum(
            jnp.dot(v, w1t, preferred_element_type=jnp.float32), 0.0)  # (BN, T//r)
        return jnp.dot(h, w2t, preferred_element_type=jnp.float32)     # (BN, T)

    att = jax.nn.sigmoid(shared_mlp(avg) + shared_mlp(mx))    # (BN, T)

    # Broadcast attention over D, apply, final ReLU. Output last dim stays
    # lane-dense (D should be a multiple of 128 for best store bandwidth).
    out = jnp.maximum(att[:, :, None] * xf, 0.0)              # (BN, T, D)
    o_ref[...] = out.astype(o_ref.dtype)


def ta_forward(x, w1, w2, *, block_bytes=2 * 1024 * 1024):
    """TA_ forward.

    x:  (N, T, D)
    w1: (T//r, T)  = sharedMLP[0].weight  (Linear(T, T//r, bias=False))
    w2: (T, T//r)  = sharedMLP[2].weight  (Linear(T//r, T, bias=False))
    """
    N, T, D = x.shape
    r = w1.shape[0]
    assert w1.shape == (r, T) and w2.shape == (T, r)

    # Choose the batch-chunk size BN so one x block is ~block_bytes (HBM-bound
    # op: big blocks amortize per-step overhead while the double-buffered
    # in+out footprint (~4x block) stays inside scoped VMEM on v5e/v6e/v7x).
    row_bytes = int(T) * int(D) * int(x.dtype.itemsize)
    bn = max(1, int(block_bytes) // row_bytes)
    if bn >= 8:
        bn -= bn % 8                      # keep the pooled (BN, T) slabs sublane-aligned
    bn = int(min(bn, N))

    grid = int(pl.cdiv(N, bn))
    n_pad = grid * bn
    x_in = x if n_pad == N else jnp.pad(x, ((0, n_pad - N), (0, 0), (0, 0)))

    # Pre-transpose the tiny weights once so the kernel uses plain row-major dots.
    w1t = w1.T                            # (T, T//r)
    w2t = w2.T                            # (T//r, T)

    out = pl.pallas_call(
        ta_kernel,
        out_shape=jax.ShapeDtypeStruct((n_pad, T, D), x.dtype),
        grid=(grid,),
        in_specs=[
            pl.BlockSpec((bn, T, D), lambda n: (n, 0, 0)),
            pl.BlockSpec((T, r), lambda n: (0, 0)),
            pl.BlockSpec((r, T), lambda n: (0, 0)),
        ],
        out_specs=pl.BlockSpec((bn, T, D), lambda n: (n, 0, 0)),
        compiler_params=pltpu.CompilerParams(
            dimension_semantics=("parallel",),
        ),
    )(x_in, w1t, w2t)

    return out if n_pad == N else out[:N]


def ta_reference(x, w1, w2):
    # Pure-JAX reference for correctness checking.
    avg = jnp.mean(x, axis=-1)                                # (N, T)
    mx = jnp.max(x, axis=-1)                                  # (N, T)

    def mlp(v):                                               # (N, T) -> (N, T)
        h = jnp.maximum(v @ w1.T, 0.0)                        # (N, T//r)
        return h @ w2.T                                       # (N, T)

    att = jax.nn.sigmoid(mlp(avg) + mlp(mx))                  # (N, T)
    return jnp.maximum(att[:, :, None] * x, 0.0)


if __name__ == "__main__":
    T = TIME_WINDOWS
    D = 256  # e.g. 16x16 spatial flattened to D=256 (multiple of 128 -> lane-dense)

    key = jax.random.PRNGKey(0)
    kx, k1, k2, kx2 = jax.random.split(key, 4)

    # Deterministic bias-free Linear weights (PyTorch layout):
    #   Linear(T, T//RATIO).weight -> (T//RATIO, T)
    #   Linear(T//RATIO, T).weight -> (T, T//RATIO)
    bound1 = 1.0 / (T ** 0.5)
    bound2 = 1.0 / ((T // RATIO) ** 0.5)
    w1 = jax.random.uniform(k1, (T // RATIO, T), jnp.float32, -bound1, bound1)
    w2 = jax.random.uniform(k2, (T, T // RATIO), jnp.float32, -bound2, bound2)

    # Case 1: small batch (single grid step, BN == N).
    x = jax.random.normal(kx, (2, T, D), dtype=jnp.float32)
    out = jax.block_until_ready(ta_forward(x, w1, w2))
    ref = jax.block_until_ready(ta_reference(x, w1, w2))
    assert out.shape == x.shape and out.dtype == x.dtype
    assert jnp.allclose(out, ref, atol=1e-5, rtol=1e-5), "mismatch vs reference (case 1)"

    # Case 2: batch not divisible by the chunk size -> exercises padding + grid > 1.
    x2 = jax.random.normal(kx2, (20, T, D), dtype=jnp.float32)
    out2 = jax.block_until_ready(ta_forward(x2, w1, w2, block_bytes=8 * T * D * 4))
    ref2 = jax.block_until_ready(ta_reference(x2, w1, w2))
    assert jnp.allclose(out2, ref2, atol=1e-5, rtol=1e-5), "mismatch vs reference (case 2)"

    print("KERNEL_OK")
</pallas_src>

<mosaic_0001>
module attributes {stable_mosaic.version = 11 : i64} {
  func.func @ta_kernel(%arg0: i32, %arg1: memref<2x8x256xf32, #tpu.memory_space<vmem>>, %arg2: memref<8x2xf32, #tpu.memory_space<vmem>>, %arg3: memref<2x8xf32, #tpu.memory_space<vmem>>, %arg4: memref<2x8x256xf32, #tpu.memory_space<vmem>>) attributes {dimension_semantics = [#tpu.dimension_semantics<parallel>], iteration_bounds = array<i64: 1>, scalar_prefetch = 0 : i64, scratch_operands = 0 : i64, tpu.core_type = #tpu.core_type<tc>, window_params = [{transform_indices = @transform_0, window_bounds = array<i64: 2, 8, 256>}, {pipeline_mode = #tpu.pipeline_mode<synchronous>, transform_indices = @transform_1, window_bounds = array<i64: 8, 2>}, {pipeline_mode = #tpu.pipeline_mode<synchronous>, transform_indices = @transform_2, window_bounds = array<i64: 2, 8>}, {transform_indices = @transform_3, window_bounds = array<i64: 2, 8, 256>}]} {
    %c0 = arith.constant 0 : index
    %c0_0 = arith.constant 0 : index
    %c0_1 = arith.constant 0 : index
    %0 = vector.load %arg1[%c0, %c0_0, %c0_1] : memref<2x8x256xf32, #tpu.memory_space<vmem>>, vector<2x8x256xf32>
    %cst = arith.constant dense<0.000000e+00> : vector<2x8xf32>
    %1 = vector.multi_reduction <add>, %0, %cst [2] : vector<2x8x256xf32> to vector<2x8xf32>
    %cst_2 = arith.constant 3.906250e-03 : f32
    %2 = vector.broadcast %cst_2 : f32 to vector<2x8xf32>
    %3 = arith.mulf %1, %2 : vector<2x8xf32>
    %cst_3 = arith.constant dense<0xFF800000> : vector<2x8xf32>
    %4 = vector.multi_reduction <maximumf>, %0, %cst_3 [2] : vector<2x8x256xf32> to vector<2x8xf32>
    %c0_4 = arith.constant 0 : index
    %c0_5 = arith.constant 0 : index
    %5 = vector.load %arg2[%c0_4, %c0_5] : memref<8x2xf32, #tpu.memory_space<vmem>>, vector<8x2xf32>
    %c0_6 = arith.constant 0 : index
    %c0_7 = arith.constant 0 : index
    %6 = vector.load %arg3[%c0_6, %c0_7] : memref<2x8xf32, #tpu.memory_space<vmem>>, vector<2x8xf32>
    %cst_8 = arith.constant dense<0.000000e+00> : vector<2x2xf32>
    %7 = tpu.matmul %3, %5, %cst_8 {dimension_numbers = #tpu.dot_dimension_numbers<[1], [0], [0], [1], [0, 0, 1, 1], [], []>} : vector<2x8xf32>, vector<8x2xf32>, vector<2x2xf32> -> vector<2x2xf32>
    %cst_9 = arith.constant 0.000000e+00 : f32
    %8 = vector.broadcast %cst_9 : f32 to vector<2x2xf32>
    %9 = arith.maximumf %7, %8 : vector<2x2xf32>
    %cst_10 = arith.constant dense<0.000000e+00> : vector<2x8xf32>
    %10 = tpu.matmul %9, %6, %cst_10 {dimension_numbers = #tpu.dot_dimension_numbers<[1], [0], [0], [1], [0, 0, 1, 1], [], []>} : vector<2x2xf32>, vector<2x8xf32>, vector<2x8xf32> -> vector<2x8xf32>
    %cst_11 = arith.constant dense<0.000000e+00> : vector<2x2xf32>
    %11 = tpu.matmul %4, %5, %cst_11 {dimension_numbers = #tpu.dot_dimension_numbers<[1], [0], [0], [1], [0, 0, 1, 1], [], []>} : vector<2x8xf32>, vector<8x2xf32>, vector<2x2xf32> -> vector<2x2xf32>
    %cst_12 = arith.constant 0.000000e+00 : f32
    %12 = vector.broadcast %cst_12 : f32 to vector<2x2xf32>
    %13 = arith.maximumf %11, %12 : vector<2x2xf32>
    %cst_13 = arith.constant dense<0.000000e+00> : vector<2x8xf32>
    %14 = tpu.matmul %13, %6, %cst_13 {dimension_numbers = #tpu.dot_dimension_numbers<[1], [0], [0], [1], [0, 0, 1, 1], [], []>} : vector<2x2xf32>, vector<2x8xf32>, vector<2x8xf32> -> vector<2x8xf32>
    %15 = arith.addf %10, %14 : vector<2x8xf32>
    %16 = arith.negf %15 : vector<2x8xf32>
    %17 = math.exp %16 : vector<2x8xf32>
    %cst_14 = arith.constant 1.000000e+00 : f32
    %18 = vector.broadcast %cst_14 : f32 to vector<2x8xf32>
    %19 = arith.addf %18, %17 : vector<2x8xf32>
    %20 = arith.divf %18, %19 : vector<2x8xf32>
    %21 = vector.shape_cast %20 : vector<2x8xf32> to vector<2x8x1xf32>
    %22 = vector.broadcast %21 : vector<2x8x1xf32> to vector<2x8x256xf32>
    %23 = arith.mulf %22, %0 : vector<2x8x256xf32>
    %cst_15 = arith.constant 0.000000e+00 : f32
    %24 = vector.broadcast %cst_15 : f32 to vector<2x8x256xf32>
    %25 = arith.maximumf %23, %24 : vector<2x8x256xf32>
    %c0_16 = arith.constant 0 : index
    %c0_17 = arith.constant 0 : index
    %c0_18 = arith.constant 0 : index
    %26 = vector.load %arg4[%c0_16, %c0_17, %c0_18] : memref<2x8x256xf32, #tpu.memory_space<vmem>>, vector<2x8x256xf32>
    tpu.vector_store %arg4[%c0_16, %c0_17, %c0_18], %25 {strides = array<i32>} : memref<2x8x256xf32, #tpu.memory_space<vmem>>, vector<2x8x256xf32>,
    return
  }
  func.func @transform_0(%arg0: i32) -> (i32, i32, i32) {
    %c0_i32 = arith.constant 0 : i32
    %c0_i32_0 = arith.constant 0 : i32
    %c0_i32_1 = arith.constant 0 : i32
    return %arg0, %c0_i32, %c0_i32_0 : i32, i32, i32
  }
  func.func @transform_1(%arg0: i32) -> (i32, i32) {
    %c0_i32 = arith.constant 0 : i32
    %c0_i32_0 = arith.constant 0 : i32
    %c0_i32_1 = arith.constant 0 : i32
    return %c0_i32, %c0_i32_0 : i32, i32
  }
  func.func @transform_2(%arg0: i32) -> (i32, i32) {
    %c0_i32 = arith.constant 0 : i32
    %c0_i32_0 = arith.constant 0 : i32
    %c0_i32_1 = arith.constant 0 : i32
    return %c0_i32, %c0_i32_0 : i32, i32
  }
  func.func @transform_3(%arg0: i32) -> (i32, i32, i32) {
    %c0_i32 = arith.constant 0 : i32
    %c0_i32_0 = arith.constant 0 : i32
    %c0_i32_1 = arith.constant 0 : i32
    return %arg0, %c0_i32, %c0_i32_0 : i32, i32, i32
  }
}

</mosaic_0001>

<llo_original>
// kernel: tpu_custom_call.1
$region0: #{tpu_custom_call.1}
  #allocation0 [shape = 'u32[]', space=smem, size = 0x4, offset = 0x4, fixed_abs, tag = 'smem constant byte address 0x4 - core index']
  #allocation1 [shape = 'u32[72,128]{1,0:T(1,128)}', space=vmem, size = 0x9000, scoped, tag = 'internal scratch']
  %s0 = inlined_call_operand.hbm [shape: f32[2,8,256], index: 0, kind: input, shape index: {}]
  %s1 = inlined_call_operand.vmem [shape: f32[8,2], index: 1, kind: input, shape index: {}]
  %s2 = inlined_call_operand.vmem [shape: f32[2,8], index: 2, kind: input, shape index: {}]
  %s3 = inlined_call_operand.hbm [shape: f32[2,8,256], index: 3, kind: output, shape index: {}]
  %s4 = sld [smem:[#allocation0]]
  $region26: #{tpu_custom_call.1} parent=0
    _
  %s6 = ssub.s32 1, %s4
  %s7 = scalar_select 0, %s6, %s4
  $region1: #{tpu_custom_call.1} parent=0
    #allocation2 [shape = 'u8[16384]{0}', space=vmem, size = 0x4000, scoped, tag = 'input window, operand 0, single buffered']
    #allocation3 [shape = 's32[1]{0}', space=sflag, size = 0x4, scoped, tag = 'scoped memory for tpu_custom_call.1']
    #allocation4 [shape = 's32[1]{0}', space=sflag, size = 0x4, scoped, tag = 'scoped memory for tpu_custom_call.1']
    #allocation5 [shape = 'u8[16384]{0}', space=vmem, size = 0x4000, scoped, tag = 'output window, operand 0, single buffered']
    %8 = vsyncpa [#allocation3], 0
    %9 = vsyncpa [#allocation4], 0
    // Predicated region
    $region2: #{tpu_custom_call.1} parent=1 // pred_check
      _
    $region3: #{tpu_custom_call.1} parent=1 // pred_check_branch
      %11 = sbr.rel (0) target = $region5
    $region4: #{tpu_custom_call.1} parent=1 // pred_region
      %13 = vsyncadd [#allocation3], 0
      %s14 = sshll.u32 %s0, 4
      %s15 = int_to_ptr.hbm [resolvable:$true] %s14
      %s16 = sshll.u32 [#allocation2], 4
      %s17 = int_to_ptr.vmem [resolvable:$true] %s16
      %22 = dma.hbm_to_vmem [thread:$0]  %s15, 512, %s17, [#allocation3], 256, 256, 16
    $region5: #{tpu_custom_call.1} parent=1 // pred_fallthru
      _
    // Predicated region
    $region6: #{tpu_custom_call.1} parent=1 // pred_check
      _
    $region7: #{tpu_custom_call.1} parent=1 // pred_check_branch
      %24 = sbr.rel (0) target = $region9
    $region8: #{tpu_custom_call.1} parent=1 // pred_region
      _
    $region9: #{tpu_custom_call.1} parent=1 // pred_fallthru
      _
    // Predicated region
    $region10: #{tpu_custom_call.1} parent=1 // pred_check
      _
    $region11: #{tpu_custom_call.1} parent=1 // pred_check_branch
      %26 = sbr.rel (0) target = $region13
    $region12: #{tpu_custom_call.1} parent=1 // pred_region
      _
    $region13: #{tpu_custom_call.1} parent=1 // pred_fallthru
      _
    // Predicated region
    $region14: #{tpu_custom_call.1} parent=1 // pred_check
      _
    $region15: #{tpu_custom_call.1} parent=1 // pred_check_branch
      %28 = sbr.rel (0) target = $region17
    $region16: #{tpu_custom_call.1} parent=1 // pred_region
      %30 = dma.done [#allocation3], 512
    $region17: #{tpu_custom_call.1} parent=1 // pred_fallthru
      _
    %v31 = vld [vmem:[#allocation2] sm:$0xff]
    %v32 = vld [vmem:[#allocation2 + $0x8] sm:$0xff]
    %v33 = vld [vmem:[#allocation2 + $0x10] sm:$0xff]
    %v34 = vld [vmem:[#allocation2 + $0x18] sm:$0xff]
    %v35 = vadd.f32 %v31, %v32
    %36 = vadd.xlane.f32.xlu0 %v35
    %v37 = vpop.xlane.xlu0 %36
    %v38 = vadd.f32 %v33, %v34
    %39 = vadd.xlane.f32.xlu0 %v38
    %v40 = vpop.xlane.xlu0 %39
    %v41 = vmul.f32 %v37, 0.00390625
    %v42 = vmul.f32 %v40, 0.00390625
    %v43 = vmax.f32 %v31, %v32
    %44 = vmax.xlane.f32.xlu0 %v43
    %v45 = vpop.xlane.xlu0 %44
    %v46 = vmax.f32 %v33, %v34
    %47 = vmax.xlane.f32.xlu0 %v46
    %v48 = vpop.xlane.xlu0 %47
    %v49 = vld [vmem:[%s1] sm:$0xff]
    %v50 = vld [vmem:[%s2] sm:$0x3]
    %v53 = vlaneseq
    %v54 = vand.u32 %v53, 127
    %v55 = vperm.slane %v41, %v54
    %v56 = vperm.slane %v42, %v54
    %vm57 = vcmask 1041409
    %v58 = vsel %vm57, %v56, %v55
    %vm59 = vcmask 64512
    %v60 = vsel %vm59, %v58, 0
    %62 = vmatpush.msra.mxu0 0.0
    %63 = vmatpush.msra.mxu0 0.0
    %64 = vmatpush.msra.mxu0 0.0
    %65 = vmatpush.msra.mxu0 0.0
    %66 = vmatpush.msra.mxu0 0.0
    %67 = vmatpush.msra.mxu0 0.0
    %68 = vmatpush.msra.mxu0 0.0
    %69 = vmatpush.msra.mxu0 0.0
    %70 = vmatpush.msra.mxu0 0.0
    %71 = vmatpush.msra.mxu0 0.0
    %72 = vmatpush.msra.mxu0 0.0
    %73 = vmatpush.msra.mxu0 0.0
    %74 = vmatpush.msra.mxu0 0.0
    %75 = vmatpush.msra.mxu0 0.0
    %76 = vmatpush.msra.mxu0 0.0
    %77 = vmatpush.msra.mxu0 %v49
    %78 = vmatmul.f32.gmra.mxu0 %v60
    %v79 = vpop.f32.mrf.mxu0
    %v80 = vadd.f32 0.0, %v79
    %81 = vdwg.mxu0
    %v82 = vmax.f32 %v80, 0.0
    %v85 = vperm.slane %v45, %v54
    %v86 = vperm.slane %v48, %v54
    %v87 = vsel %vm57, %v86, %v85
    %v88 = vsel %vm59, %v87, 0
    %90 = vmatpush.msra.mxu0 0.0
    %91 = vmatpush.msra.mxu0 0.0
    %92 = vmatpush.msra.mxu0 0.0
    %93 = vmatpush.msra.mxu0 0.0
    %94 = vmatpush.msra.mxu0 0.0
    %95 = vmatpush.msra.mxu0 0.0
    %96 = vmatpush.msra.mxu0 0.0
    %97 = vmatpush.msra.mxu0 0.0
    %98 = vmatpush.msra.mxu0 0.0
    %99 = vmatpush.msra.mxu0 0.0
    %100 = vmatpush.msra.mxu0 0.0
    %101 = vmatpush.msra.mxu0 0.0
    %102 = vmatpush.msra.mxu0 0.0
    %103 = vmatpush.msra.mxu0 0.0
    %104 = vmatpush.msra.mxu0 0.0
    %105 = vmatpush.msra.mxu0 %v49
    %106 = vmatmul.f32.gmra.mxu0 %v88
    %v107 = vpop.f32.mrf.mxu0
    %v108 = vadd.f32 0.0, %v107
    %109 = vdwg.mxu0
    %v110 = vmax.f32 %v108, 0.0
    %vm111 = vcmask 15360
    %v113 = vsel %vm111, %v110, 0
    %vm115 = vcmask 1041408
    %v117 = vsel %vm115, %v50, 0
    %119 = vmatpush.msra.mxu0 0.0
    %120 = vmatpush.msra.mxu0 0.0
    %121 = vmatpush.msra.mxu0 0.0
    %122 = vmatpush.msra.mxu0 0.0
    %123 = vmatpush.msra.mxu0 0.0
    %124 = vmatpush.msra.mxu0 0.0
    %125 = vmatpush.msra.mxu0 0.0
    %126 = vmatpush.msra.mxu0 0.0
    %127 = vmatpush.msra.mxu0 0.0
    %128 = vmatpush.msra.mxu0 0.0
    %129 = vmatpush.msra.mxu0 0.0
    %130 = vmatpush.msra.mxu0 0.0
    %131 = vmatpush.msra.mxu0 0.0
    %132 = vmatpush.msra.mxu0 0.0
    %133 = vmatpush.msra.mxu0 0.0
    %134 = vmatpush.msra.mxu0 %v117
    %135 = vmatmul.f32.gmra.mxu0 %v113
    %v136 = vpop.f32.mrf.mxu0
    %v137 = vadd.f32 0.0, %v136
    %138 = vdwg.mxu0
    %v140 = vsel %vm111, %v82, 0
    %142 = vmatpush.msra.mxu0 0.0
    %143 = vmatpush.msra.mxu0 0.0
    %144 = vmatpush.msra.mxu0 0.0
    %145 = vmatpush.msra.mxu0 0.0
    %146 = vmatpush.msra.mxu0 0.0
    %147 = vmatpush.msra.mxu0 0.0
    %148 = vmatpush.msra.mxu0 0.0
    %149 = vmatpush.msra.mxu0 0.0
    %150 = vmatpush.msra.mxu0 0.0
    %151 = vmatpush.msra.mxu0 0.0
    %152 = vmatpush.msra.mxu0 0.0
    %153 = vmatpush.msra.mxu0 0.0
    %154 = vmatpush.msra.mxu0 0.0
    %155 = vmatpush.msra.mxu0 0.0
    %156 = vmatpush.msra.mxu0 0.0
    %157 = vmatpush.msra.mxu0 %v117
    %158 = vmatmul.f32.gmra.mxu0 %v140
    %v159 = vpop.f32.mrf.mxu0
    %v160 = vadd.f32 %v137, %v159
    %161 = vdwg.mxu0
    %v162 = vxor.u32 %v160, 2147483648
    %v163 = vmul.f32 %v162, 1.442695
    %v164 = vpow.pop %v163
    %v165 = vadd.f32 %v164, 1.0
    %v166 = vrcp.pop %v165
    %v167 = vmul.f32 %v165, %v166
    %v168 = vsub.f32 1.0, %v167
    %v169 = vmul.f32 %v166, %v168
    %v170 = vadd.f32 %v166, %v169
    %vm171 = vweird.f32 %v165
    %vm172 = vweird.f32 %v166
    %vm173 = vmor %vm171, %vm172
    %v174 = vsel %vm173, %v166, %v170
    %v175 = vand.u32 2147483647, %v165
    %vm176 = vcmp.eq.f32.partialorder %v175, 8.507059e+37
    %v177 = vand.u32 %v165, 2147483648
    %v178 = vor.u32 1.1754944e-38, %v177
    %v179 = vsel %vm176, %v178, %v174
    %v180 = vmul.f32 1.0, %v179
    %v181 = vperm.slane %v180, 0
    %v182 = vlaneseq
    %v183 = vshrl.u32 %v182, 7
    %185 = vset.pattern.permute.xlu0 %v183
    %186 = vperm.xlu0 %185, %v181
    %v187 = vpop.permute.xlu0 %186
    %v188 = vperm.slane %v180, 1
    %v189 = vlaneseq
    %v190 = vshrl.u32 %v189, 7
    %192 = vset.pattern.permute.xlu0 %v190
    %193 = vperm.xlu0 %192, %v188
    %v194 = vpop.permute.xlu0 %193
    %v195 = vmul.f32 %v187, %v31
    %v196 = vmul.f32 %v187, %v32
    %v197 = vmul.f32 %v194, %v33
    %v198 = vmul.f32 %v194, %v34
    %v199 = vmax.f32 %v195, 0.0
    %v200 = vmax.f32 %v196, 0.0
    %v201 = vmax.f32 %v197, 0.0
    %v202 = vmax.f32 %v198, 0.0
    %203 = vst [vmem:[#allocation5] sm:$0xff] %v199
    %204 = vst [vmem:[#allocation5 + $0x8] sm:$0xff] %v200
    %205 = vst [vmem:[#allocation5 + $0x10] sm:$0xff] %v201
    %206 = vst [vmem:[#allocation5 + $0x18] sm:$0xff] %v202
    // Predicated region
    $region18: #{tpu_custom_call.1} parent=1 // pred_check
      _
    $region19: #{tpu_custom_call.1} parent=1 // pred_check_branch
      %208 = sbr.rel (0) target = $region21
    $region20: #{tpu_custom_call.1} parent=1 // pred_region
      %210 = vsyncadd [#allocation4], 0
      %s211 = sshll.u32 [#allocation5], 4
      %s212 = int_to_ptr.vmem [resolvable:$true] %s211
      %s213 = sshll.u32 %s3, 4
      %s214 = int_to_ptr.hbm [resolvable:$true] %s213
      %219 = dma.vmem_to_hbm [thread:$0]  %s212, 512, %s214, [#allocation4], 256, 256, 16
    $region21: #{tpu_custom_call.1} parent=1 // pred_fallthru
      _
    // Predicated region
    $region22: #{tpu_custom_call.1} parent=1 // pred_check
      _
    $region23: #{tpu_custom_call.1} parent=1 // pred_check_branch
      %221 = sbr.rel (0) target = $region25
    $region24: #{tpu_custom_call.1} parent=1 // pred_region
      %223 = dma.done [#allocation4], 512
    $region25: #{tpu_custom_call.1} parent=1 // pred_fallthru
      _
    %224 = vsyncpa [#allocation3], 1
    %225 = vsyncpa [#allocation4], 1

</llo_original>
